<compile_context>
chip_gen: v5e
topology: v5e:2x2
jax: 0.10.0
libtpu: 0.0.40
codegen_flags: <defaults>
</compile_context>

<pallas_src>
import jax
import jax.numpy as jnp
from jax.experimental import pallas as pl
from jax.experimental.pallas import tpu as pltpu


def _sublane_pack(itemsize: int) -> int:
    # Rows per packed (sublane x lane) tile: f32 -> 8, bf16 -> 16, int8 -> 32.
    return 8 * max(1, 4 // max(1, itemsize))


def _choose_lane_dim(total: int) -> int:
    """Largest multiple-of-128 divisor of `total`, capped at 16384 lanes.

    Returns 0 when `total` is not divisible by 128; the caller then uses a
    (1, total) view copied by one whole-ref DMA (no masked stores involved).
    """
    if total % 128 != 0:
        return 0
    best = 128
    cap = min(total, 16384)
    for c in range(128, cap + 1, 128):
        if total % c == 0:
            best = c
    return best


def _make_dma_copy_kernel(n_rows: int, pack: int, total_bytes: int):
    """Build a chunked HBM->HBM DMA copy kernel with static chunk bounds."""
    # Only split big copies (>= 4 MiB) so multiple DMAs are in flight; small
    # copies are a single descriptor (per-DMA overhead would dominate).
    max_chunks = 4 if total_bytes >= (4 << 20) else 1
    if max_chunks > 1 and n_rows >= max_chunks * pack:
        base = -(-n_rows // max_chunks)      # ceil-div rows over chunks
        base = -(-base // pack) * pack       # round up to sublane pack (tile aligned)
        chunks = []
        r = 0
        while r < n_rows:
            size = min(base, n_rows - r)
            chunks.append((r, size))
            r += size
    else:
        chunks = [(0, n_rows)]
    n_chunks = len(chunks)

    def kernel(x_hbm, o_hbm, sems):
        copies = [
            pltpu.make_async_copy(
                x_hbm.at[pl.ds(r0, rs), :],
                o_hbm.at[pl.ds(r0, rs), :],
                sems.at[i],
            )
            for i, (r0, rs) in enumerate(chunks)
        ]
        # Launch all chunks (up to 4 DMAs in flight across DMA queues), then drain.
        for cp in copies:
            cp.start()
        for cp in copies:
            cp.wait()

    return kernel, n_chunks


def _identity_copy(x: jax.Array) -> jax.Array:
    """Explicit memcpy of x via a Pallas chunked HBM->HBM DMA kernel."""
    orig_shape = x.shape
    dtype = x.dtype
    itemsize = jnp.dtype(dtype).itemsize

    total = 1
    for d in orig_shape:
        total *= d
    if total == 0:
        return x  # nothing to copy

    lane = _choose_lane_dim(total)
    if lane > 0:
        C = lane
        R = total // C
    else:
        # Awkward total: single whole-ref DMA of a (1, total) view -- a byte
        # copy, so no masked partial vector stores ever happen.
        C = total
        R = 1
    x2d = x.reshape(R, C)

    total_bytes = total * itemsize
    kernel, n_chunks = _make_dma_copy_kernel(R, _sublane_pack(itemsize), total_bytes)

    out2d = pl.pallas_call(
        kernel,
        out_shape=jax.ShapeDtypeStruct((R, C), dtype),
        in_specs=[pl.BlockSpec(memory_space=pl.ANY)],   # raw HBM ref, no auto-DMA
        out_specs=pl.BlockSpec(memory_space=pl.ANY),    # raw HBM ref, written by DMA
        scratch_shapes=[pltpu.SemaphoreType.DMA((n_chunks,))],
        cost_estimate=pl.CostEstimate(
            flops=0,
            transcendentals=0,
            bytes_accessed=2 * total_bytes,  # 1x HBM read + 1x HBM write
        ),
    )(x2d)

    return out2d.reshape(orig_shape)


def identity_mapping(x: jax.Array, *, materialize: bool = False) -> jax.Array:
    """Pallas implementation of IdentityMapping.forward.

    Default: returns x directly -- a true identity launches no kernel and
    moves zero HBM bytes (the fastest possible implementation on any chip,
    and what a donated-input caller wants).  Set materialize=True to force a
    fresh output buffer via the chunked HBM->HBM DMA copy kernel.
    """
    if not materialize:
        return x
    return _identity_copy(x)


if __name__ == "__main__":
    key = jax.random.PRNGKey(0)
    # NCHW input, consistent with PyTorch conv-style modules.
    x = jax.random.normal(key, (2, 4, 16, 16), dtype=jnp.float32)

    # Fast path: true identity, no kernel launched, zero HBM traffic.
    y_fast = identity_mapping(x)
    jax.block_until_ready(y_fast)
    assert y_fast.shape == x.shape and y_fast.dtype == x.dtype
    assert bool(jnp.array_equal(y_fast, x)), "identity fast-path mismatch"

    # Explicit-copy path: exercises the Pallas HBM->HBM DMA kernel once.
    y_copy = identity_mapping(x, materialize=True)
    jax.block_until_ready(y_copy)
    assert y_copy.shape == x.shape and y_copy.dtype == x.dtype
    assert bool(jnp.array_equal(y_copy, x)), "identity copy-kernel mismatch"

    # Non-128-divisible element count: exercised via the whole-ref DMA
    # fallback (no masked partial stores).
    x_odd = jax.random.normal(jax.random.PRNGKey(0), (5, 7, 9), dtype=jnp.float32)
    y_odd = identity_mapping(x_odd, materialize=True)
    jax.block_until_ready(y_odd)
    assert bool(jnp.array_equal(y_odd, x_odd)), "identity odd-shape mismatch"

    print("KERNEL_OK")
</pallas_src>

<mosaic_0001>
module attributes {stable_mosaic.version = 11 : i64} {
  func.func @kernel(%arg0: memref<1x2048xf32, #tpu.memory_space<any>>, %arg1: memref<1x2048xf32, #tpu.memory_space<any>>, %arg2: memref<1x!tpu.dma_semaphore, #tpu.memory_space<semaphore_mem>>) attributes {dimension_semantics = [], scalar_prefetch = 0 : i64, scratch_operands = 1 : i64, tpu.core_type = #tpu.core_type<tc>} {
    %c0_i32 = arith.constant 0 : i32
    %c0_i32_0 = arith.constant 0 : i32
    %c0_i32_1 = arith.constant 0 : i32
    %0 = tpu.memref_slice %arg0[%c0_i32_0, %c0_i32_1] : memref<1x2048xf32, #tpu.memory_space<any>> -> memref<1x2048xf32, #tpu.memory_space<any>>
    %c0_i32_2 = arith.constant 0 : i32
    %c0_i32_3 = arith.constant 0 : i32
    %1 = tpu.memref_slice %arg1[%c0_i32_2, %c0_i32_3] : memref<1x2048xf32, #tpu.memory_space<any>> -> memref<1x2048xf32, #tpu.memory_space<any>>
    %2 = tpu.memref_slice %arg2[%c0_i32] : memref<1x!tpu.dma_semaphore, #tpu.memory_space<semaphore_mem>> -> memref<1x!tpu.dma_semaphore, #tpu.memory_space<semaphore_mem>>
    %3 = tpu.memref_squeeze %2 : memref<1x!tpu.dma_semaphore, #tpu.memory_space<semaphore_mem>> -> memref<!tpu.dma_semaphore, #tpu.memory_space<semaphore_mem>>
    tpu.enqueue_dma source(%0 : memref<1x2048xf32, #tpu.memory_space<any>>) target(%1 : memref<1x2048xf32, #tpu.memory_space<any>>) target_semaphore(%3 : memref<!tpu.dma_semaphore, #tpu.memory_space<semaphore_mem>>)
    %c0_i32_4 = arith.constant 0 : i32
    %c0_i32_5 = arith.constant 0 : i32
    %c0_i32_6 = arith.constant 0 : i32
    %4 = tpu.memref_slice %arg0[%c0_i32_5, %c0_i32_6] : memref<1x2048xf32, #tpu.memory_space<any>> -> memref<1x2048xf32, #tpu.memory_space<any>>
    %c0_i32_7 = arith.constant 0 : i32
    %c0_i32_8 = arith.constant 0 : i32
    %5 = tpu.memref_slice %arg1[%c0_i32_7, %c0_i32_8] : memref<1x2048xf32, #tpu.memory_space<any>> -> memref<1x2048xf32, #tpu.memory_space<any>>
    %6 = tpu.memref_slice %arg2[%c0_i32_4] : memref<1x!tpu.dma_semaphore, #tpu.memory_space<semaphore_mem>> -> memref<1x!tpu.dma_semaphore, #tpu.memory_space<semaphore_mem>>
    %7 = tpu.memref_squeeze %6 : memref<1x!tpu.dma_semaphore, #tpu.memory_space<semaphore_mem>> -> memref<!tpu.dma_semaphore, #tpu.memory_space<semaphore_mem>>
    tpu.wait_dma2 semaphore(%7 : memref<!tpu.dma_semaphore, #tpu.memory_space<semaphore_mem>>) src(%4 : memref<1x2048xf32, #tpu.memory_space<any>>) dst(%5 : memref<1x2048xf32, #tpu.memory_space<any>>)
    return
  }
}

</mosaic_0001>

<llo_original>
// kernel: tpu_custom_call.1
$region0: #{tpu_custom_call.1}
  #allocation0 [shape = 'u32[]', space=smem, size = 0x4, offset = 0x4, fixed_abs, tag = 'smem constant byte address 0x4 - core index']
  #allocation1 [shape = 'u32[72,128]{1,0:T(1,128)}', space=vmem, size = 0x9000, scoped, tag = 'internal scratch']
  #allocation2 [shape = 's32[1]{0}', space=sflag, size = 0x4, scoped, tag = 'scratch operand']
  #allocation3 [shape = 's32[]', space=sflag, size = 0x4, offset = 0, fixed_abs, tag = 'sflag constant byte address 0x0 - dummy sync flag']
  #allocation4 [shape = 'u32[0]{0}', space=smem, size = 0, offset = 0, fixed_abs, tag = 'smem constant byte address 0x0 - null']
  %s0 = inlined_call_operand.hbm [shape: f32[1,2048], index: 0, kind: input, shape index: {}]
  %s1 = inlined_call_operand.hbm [shape: f32[1,2048], index: 1, kind: output, shape index: {}]
  %s2 = sld [smem:[#allocation0]]
  $region2: #{tpu_custom_call.1} parent=0
    _
  %s4 = ssub.s32 1, %s2
  %s5 = scalar_select 0, %s4, %s2
  %s7 = sshll.u32 1, 14
  %s8 = sxor.u32 4294967295, %s7
  %s10 = sshll.u32 %s0, 4
  %s11 = int_to_ptr.hbm [resolvable:$true] %s10
  %s12 = sshll.u32 %s1, 4
  %s13 = int_to_ptr.hbm [resolvable:$true] %s12
  %16 = dma.general %s11, 256, %s13, [#allocation2], [#allocation3], [#allocation4], 0, 0
  %s17 = smul.u32 1, 16
  %s18 = sshll.u32 %s17, 4
  %19 = dma.done [#allocation2], %s18
  %20 = vsyncmov [#allocation2]
  %s21 = vpop.sfrf %20
  %p22 = scmp.eq.s32.totalorder %s21, 0
  %p23 = pneg %p22
  %25 = shalt.err (%p23)

</llo_original>
